<compile_context>
chip_gen: v7x
topology: tpu7x:2x2x1
jax: 0.10.0
libtpu: 0.0.40
codegen_flags: <defaults>
</compile_context>

<pallas_src>
import jax
import jax.numpy as jnp
from jax.experimental import pallas as pl
from jax.experimental.pallas import tpu as pltpu

_LANES = 128
_TILE_BYTES = 2 * 1024 * 1024          # ~2 MiB per mel buffer (per input)
_SUBLANE = {4: 8, 2: 16, 1: 32}        # itemsize -> packed sublane multiple


def _make_kernel(true_rows, tile_rows, lanes, need_mask,
                 inv_mel_count, inv_small_count):
    """Build the kernel with static tiling params / divisors baked in."""
    rows_mult8 = (tile_rows % 8 == 0)

    def kernel(mel_p_ref, mel_t_ref,
               en_p_ref, en_t_ref,
               pi_p_ref, pi_t_ref,
               logdur_p_ref, dur_t_ref,
               out_ref, acc_ref, small_ref):
        i = pl.program_id(0)

        # ---- step 0: zero the vector accumulator and fold the small ------
        # ---- (B, T) MSE partial sums (hidden under the next tile's DMA) --
        @pl.when(i == 0)
        def _init():
            acc_ref[...] = jnp.zeros_like(acc_ref)

            en_d = (en_p_ref[...].astype(jnp.float32)
                    - en_t_ref[...].astype(jnp.float32))
            pi_d = (pi_p_ref[...].astype(jnp.float32)
                    - pi_t_ref[...].astype(jnp.float32))
            log_dur_t = jnp.log(dur_t_ref[...].astype(jnp.float32) + 1.0)
            du_d = logdur_p_ref[...].astype(jnp.float32) - log_dur_t

            small_ref[0] = jnp.sum(en_d * en_d)
            small_ref[1] = jnp.sum(pi_d * pi_d)
            small_ref[2] = jnp.sum(du_d * du_d)

        # ---- steady state: stream mel tiles, VPU-only partial |diff| sum -
        diff = (mel_p_ref[...].astype(jnp.float32)
                - mel_t_ref[...].astype(jnp.float32))
        ad = jnp.abs(diff)
        if need_mask:
            row = jax.lax.broadcasted_iota(jnp.int32, (tile_rows, lanes), 0)
            # where (select), not multiply: OOB garbage/NaN must be replaced.
            ad = jnp.where(i * tile_rows + row < true_rows, ad, 0.0)
        if rows_mult8:
            acc_ref[...] += ad.reshape(tile_rows // 8, 8, lanes).sum(axis=0)
        else:
            acc_ref[...] += jnp.sum(ad, axis=0, keepdims=True)

        # ---- finalize: single XLU reduce + scalar combine + SMEM writes --
        @pl.when(i == pl.num_programs(0) - 1)
        def _finalize():
            mel_loss = jnp.sum(acc_ref[...]) * inv_mel_count
            energy_loss = small_ref[0] * inv_small_count
            pitch_loss = small_ref[1] * inv_small_count
            duration_loss = small_ref[2] * inv_small_count
            total_loss = mel_loss + energy_loss + pitch_loss + duration_loss

            out_ref[0] = total_loss
            out_ref[1] = mel_loss
            out_ref[2] = energy_loss
            out_ref[3] = pitch_loss
            out_ref[4] = duration_loss

    return kernel


def fastspeech_loss(mel_predicted, energy_predicted, pitch_predicted,
                    log_duration_predicted, mel_target, energy_target,
                    pitch_target, duration_predictor_target,
                    *, tile_bytes=_TILE_BYTES):
    """Returns (total_loss, mel_loss, energy_loss, pitch_loss, duration_loss)."""
    mel_count = int(mel_predicted.size)       # true divisor for L1 mean
    small_count = int(energy_predicted.size)  # true divisor for MSE means
    itemsize = jnp.dtype(mel_predicted.dtype).itemsize
    sub = _SUBLANE.get(itemsize, 8)

    # Free (no pad, no copy) lane-dense view of the mel stream.
    if mel_count % _LANES == 0:
        lanes = _LANES
    else:
        lanes = int(mel_predicted.shape[-1])  # full last dim -> always legal
    rows = mel_count // lanes
    mel_p2 = mel_predicted.reshape(rows, lanes)
    mel_t2 = mel_target.reshape(rows, lanes)

    # Tile selection: biggest tile within the per-buffer byte budget.
    max_rows = max(sub, (tile_bytes // (lanes * itemsize)) // sub * sub)
    if rows <= max_rows:
        tile_rows = rows                      # single full-extent block
        grid = (1,)
        need_mask = False
    else:
        tile_rows = max_rows                  # multiple of the sublane pack
        grid = (pl.cdiv(rows, tile_rows),)
        need_mask = (rows % tile_rows != 0)

    acc_sub = 8 if tile_rows % 8 == 0 else 1

    mel_spec = pl.BlockSpec((tile_rows, lanes), lambda i: (i, 0))
    # Small (B, T) tensors: ~two orders of magnitude smaller; whole arrays
    # resident in VMEM across the grid.
    # TODO(synk): for very large (B, T) on v7x (64 MiB VMEM) reduce these in
    # the wrapper instead of keeping all six resident for the whole grid.
    small_spec = pl.BlockSpec(memory_space=pltpu.MemorySpace.VMEM)

    kernel = _make_kernel(rows, tile_rows, lanes, need_mask,
                          1.0 / float(mel_count), 1.0 / float(small_count))

    small_tensors = (energy_predicted, energy_target,
                     pitch_predicted, pitch_target,
                     log_duration_predicted, duration_predictor_target)
    small_bytes = sum(int(x.size) * jnp.dtype(x.dtype).itemsize
                      for x in small_tensors)
    cost = pl.CostEstimate(
        flops=int(3 * mel_count + 8 * small_count),
        transcendentals=int(small_count),
        bytes_accessed=int(2 * mel_count * itemsize + small_bytes + 5 * 4))

    losses = pl.pallas_call(
        kernel,
        out_shape=jax.ShapeDtypeStruct((5,), jnp.float32),
        grid=grid,
        in_specs=[mel_spec, mel_spec,
                  small_spec, small_spec,
                  small_spec, small_spec,
                  small_spec, small_spec],
        out_specs=pl.BlockSpec(memory_space=pltpu.MemorySpace.SMEM),
        scratch_shapes=[pltpu.VMEM((acc_sub, lanes), jnp.float32),
                        pltpu.SMEM((3,), jnp.float32)],
        compiler_params=pltpu.CompilerParams(
            dimension_semantics=("arbitrary",)),
        cost_estimate=cost,
    )(mel_p2, mel_t2,
      energy_predicted, energy_target,
      pitch_predicted, pitch_target,
      log_duration_predicted, duration_predictor_target)

    return (losses[0], losses[1], losses[2], losses[3], losses[4])


def _reference(mel_p, en_p, pi_p, logdur_p, mel_t, en_t, pi_t, dur_t):
    log_dur_t = jnp.log(dur_t.astype(jnp.float32) + 1.0)
    mel_loss = jnp.mean(jnp.abs(mel_p.astype(jnp.float32)
                                - mel_t.astype(jnp.float32)))
    energy_loss = jnp.mean((en_p - en_t) ** 2)
    pitch_loss = jnp.mean((pi_p - pi_t) ** 2)
    duration_loss = jnp.mean((logdur_p - log_dur_t) ** 2)
    total = mel_loss + energy_loss + pitch_loss + duration_loss
    return total, mel_loss, energy_loss, pitch_loss, duration_loss


def _run_case(key, B, T, n_mels, mel_dtype=jnp.float32,
              tile_bytes=_TILE_BYTES, rtol=1e-4, atol=1e-5):
    keys = jax.random.split(key, 8)
    mel_predicted = jax.random.normal(
        keys[0], (B, T, n_mels), dtype=jnp.float32).astype(mel_dtype)
    mel_target = jax.random.normal(
        keys[1], (B, T, n_mels), dtype=jnp.float32).astype(mel_dtype)
    energy_predicted = jax.random.normal(keys[2], (B, T), dtype=jnp.float32)
    energy_target = jax.random.normal(keys[3], (B, T), dtype=jnp.float32)
    pitch_predicted = jax.random.normal(keys[4], (B, T), dtype=jnp.float32)
    pitch_target = jax.random.normal(keys[5], (B, T), dtype=jnp.float32)
    log_duration_predicted = jax.random.normal(keys[6], (B, T), dtype=jnp.float32)
    duration_predictor_target = jax.random.randint(
        keys[7], (B, T), minval=0, maxval=10, dtype=jnp.int32)

    out = fastspeech_loss(mel_predicted, energy_predicted, pitch_predicted,
                          log_duration_predicted, mel_target, energy_target,
                          pitch_target, duration_predictor_target,
                          tile_bytes=tile_bytes)
    out = jax.block_until_ready(out)

    ref = _reference(mel_predicted, energy_predicted, pitch_predicted,
                     log_duration_predicted, mel_target, energy_target,
                     pitch_target, duration_predictor_target)

    for got, want in zip(out, ref):
        assert jnp.allclose(got, want, rtol=rtol, atol=atol), (got, want)


if __name__ == "__main__":
    key = jax.random.PRNGKey(0)
    k1, k2, k3, k4, k5 = jax.random.split(key, 5)

    # Small shapes consistent with the module: single-tile, 128-lane path.
    _run_case(k1, B=2, T=8, n_mels=32)

    # mel.size % 128 != 0 -> (B*T, n_mels) full-last-dim view path.
    _run_case(k2, B=2, T=9, n_mels=80)

    # Multi-tile streaming path with a ragged, in-kernel-masked tail tile.
    _run_case(k3, B=4, T=600, n_mels=80, tile_bytes=128 * 1024)

    # Same shapes through the default ~2 MiB single-tile configuration.
    _run_case(k4, B=4, T=600, n_mels=80)

    # bf16 mel stream (halved HBM traffic), 16-row packed-sublane tiling,
    # multi-tile with masked tail.
    _run_case(k5, B=2, T=400, n_mels=64, mel_dtype=jnp.bfloat16,
              tile_bytes=64 * 1024, rtol=3e-4, atol=1e-4)

    print("KERNEL_OK")
</pallas_src>

<mosaic_0001>
module attributes {stable_mosaic.version = 11 : i64} {
  func.func @kernel(%arg0: i32, %arg1: memref<4x128xf32, #tpu.memory_space<vmem>>, %arg2: memref<4x128xf32, #tpu.memory_space<vmem>>, %arg3: memref<2x8xf32, #tpu.memory_space<vmem>>, %arg4: memref<2x8xf32, #tpu.memory_space<vmem>>, %arg5: memref<2x8xf32, #tpu.memory_space<vmem>>, %arg6: memref<2x8xf32, #tpu.memory_space<vmem>>, %arg7: memref<2x8xf32, #tpu.memory_space<vmem>>, %arg8: memref<2x8xi32, #tpu.memory_space<vmem>>, %arg9: memref<5xf32, #tpu.memory_space<smem>>, %arg10: memref<1x128xf32, #tpu.memory_space<vmem>>, %arg11: memref<3xf32, #tpu.memory_space<smem>>) attributes {dimension_semantics = [#tpu.dimension_semantics<arbitrary>], iteration_bounds = array<i64: 1>, scalar_prefetch = 0 : i64, scratch_operands = 2 : i64, tpu.core_type = #tpu.core_type<tc>, window_params = [{transform_indices = @transform_0, window_bounds = array<i64: 4, 128>}, {transform_indices = @transform_1, window_bounds = array<i64: 4, 128>}, {pipeline_mode = #tpu.pipeline_mode<synchronous>, transform_indices = @transform_2, window_bounds = array<i64: 2, 8>}, {pipeline_mode = #tpu.pipeline_mode<synchronous>, transform_indices = @transform_3, window_bounds = array<i64: 2, 8>}, {pipeline_mode = #tpu.pipeline_mode<synchronous>, transform_indices = @transform_4, window_bounds = array<i64: 2, 8>}, {pipeline_mode = #tpu.pipeline_mode<synchronous>, transform_indices = @transform_5, window_bounds = array<i64: 2, 8>}, {pipeline_mode = #tpu.pipeline_mode<synchronous>, transform_indices = @transform_6, window_bounds = array<i64: 2, 8>}, {pipeline_mode = #tpu.pipeline_mode<synchronous>, transform_indices = @transform_7, window_bounds = array<i64: 2, 8>}, {transform_indices = @transform_8, window_bounds = array<i64: 5>}]} {
    %c0_i32 = arith.constant 0 : i32
    %0 = arith.cmpi eq, %arg0, %c0_i32 : i32
    %1 = arith.extui %0 : i1 to i32
    %c0_i32_0 = arith.constant 0 : i32
    %2 = arith.cmpi ne, %1, %c0_i32_0 : i32
    scf.if %2 {
      %cst_10 = arith.constant 0.000000e+00 : f32
      %15 = vector.broadcast %cst_10 : f32 to vector<1x128xf32>
      %c0_11 = arith.constant 0 : index
      %c0_12 = arith.constant 0 : index
      %16 = vector.load %arg10[%c0_11, %c0_12] : memref<1x128xf32, #tpu.memory_space<vmem>>, vector<1x128xf32>
      tpu.vector_store %arg10[%c0_11, %c0_12], %15 {strides = array<i32>} : memref<1x128xf32, #tpu.memory_space<vmem>>, vector<1x128xf32>,
      %c0_13 = arith.constant 0 : index
      %c0_14 = arith.constant 0 : index
      %17 = vector.load %arg3[%c0_13, %c0_14] : memref<2x8xf32, #tpu.memory_space<vmem>>, vector<2x8xf32>
      %c0_15 = arith.constant 0 : index
      %c0_16 = arith.constant 0 : index
      %18 = vector.load %arg4[%c0_15, %c0_16] : memref<2x8xf32, #tpu.memory_space<vmem>>, vector<2x8xf32>
      %19 = arith.subf %17, %18 : vector<2x8xf32>
      %c0_17 = arith.constant 0 : index
      %c0_18 = arith.constant 0 : index
      %20 = vector.load %arg5[%c0_17, %c0_18] : memref<2x8xf32, #tpu.memory_space<vmem>>, vector<2x8xf32>
      %c0_19 = arith.constant 0 : index
      %c0_20 = arith.constant 0 : index
      %21 = vector.load %arg6[%c0_19, %c0_20] : memref<2x8xf32, #tpu.memory_space<vmem>>, vector<2x8xf32>
      %22 = arith.subf %20, %21 : vector<2x8xf32>
      %c0_21 = arith.constant 0 : index
      %c0_22 = arith.constant 0 : index
      %23 = vector.load %arg8[%c0_21, %c0_22] : memref<2x8xi32, #tpu.memory_space<vmem>>, vector<2x8xi32>
      %24 = arith.sitofp %23 : vector<2x8xi32> to vector<2x8xf32>
      %cst_23 = arith.constant 1.000000e+00 : f32
      %25 = vector.broadcast %cst_23 : f32 to vector<2x8xf32>
      %26 = arith.addf %24, %25 : vector<2x8xf32>
      %27 = math.log %26 : vector<2x8xf32>
      %c0_24 = arith.constant 0 : index
      %c0_25 = arith.constant 0 : index
      %28 = vector.load %arg7[%c0_24, %c0_25] : memref<2x8xf32, #tpu.memory_space<vmem>>, vector<2x8xf32>
      %29 = arith.subf %28, %27 : vector<2x8xf32>
      %30 = arith.mulf %19, %19 : vector<2x8xf32>
      %31 = vector.shape_cast %30 : vector<2x8xf32> to vector<1x2x8xf32>
      %cst_26 = arith.constant dense<0.000000e+00> : vector<1xf32>
      %32 = vector.multi_reduction <add>, %31, %cst_26 [1, 2] : vector<1x2x8xf32> to vector<1xf32>
      %33 = vector.shape_cast %32 : vector<1xf32> to vector<1x1x1xf32>
      %34 = vector.extract %33[0, 0, 0] : f32 from vector<1x1x1xf32>
      %c0_27 = arith.constant 0 : index
      %35 = memref.load %arg11[%c0_27] : memref<3xf32, #tpu.memory_space<smem>>
      memref.store %34, %arg11[%c0_27] : memref<3xf32, #tpu.memory_space<smem>>
      %36 = arith.mulf %22, %22 : vector<2x8xf32>
      %37 = vector.shape_cast %36 : vector<2x8xf32> to vector<1x2x8xf32>
      %cst_28 = arith.constant dense<0.000000e+00> : vector<1xf32>
      %38 = vector.multi_reduction <add>, %37, %cst_28 [1, 2] : vector<1x2x8xf32> to vector<1xf32>
      %39 = vector.shape_cast %38 : vector<1xf32> to vector<1x1x1xf32>
      %40 = vector.extract %39[0, 0, 0] : f32 from vector<1x1x1xf32>
      %c1 = arith.constant 1 : index
      %41 = memref.load %arg11[%c1] : memref<3xf32, #tpu.memory_space<smem>>
      memref.store %40, %arg11[%c1] : memref<3xf32, #tpu.memory_space<smem>>
      %42 = arith.mulf %29, %29 : vector<2x8xf32>
      %43 = vector.shape_cast %42 : vector<2x8xf32> to vector<1x2x8xf32>
      %cst_29 = arith.constant dense<0.000000e+00> : vector<1xf32>
      %44 = vector.multi_reduction <add>, %43, %cst_29 [1, 2] : vector<1x2x8xf32> to vector<1xf32>
      %45 = vector.shape_cast %44 : vector<1xf32> to vector<1x1x1xf32>
      %46 = vector.extract %45[0, 0, 0] : f32 from vector<1x1x1xf32>
      %c2 = arith.constant 2 : index
      %47 = memref.load %arg11[%c2] : memref<3xf32, #tpu.memory_space<smem>>
      memref.store %46, %arg11[%c2] : memref<3xf32, #tpu.memory_space<smem>>
    } else {
    }
    %c0 = arith.constant 0 : index
    %c0_1 = arith.constant 0 : index
    %3 = vector.load %arg1[%c0, %c0_1] : memref<4x128xf32, #tpu.memory_space<vmem>>, vector<4x128xf32>
    %c0_2 = arith.constant 0 : index
    %c0_3 = arith.constant 0 : index
    %4 = vector.load %arg2[%c0_2, %c0_3] : memref<4x128xf32, #tpu.memory_space<vmem>>, vector<4x128xf32>
    %5 = arith.subf %3, %4 : vector<4x128xf32>
    %6 = math.absf %5 : vector<4x128xf32>
    %c0_4 = arith.constant 0 : index
    %c0_5 = arith.constant 0 : index
    %7 = vector.load %arg10[%c0_4, %c0_5] : memref<1x128xf32, #tpu.memory_space<vmem>>, vector<1x128xf32>
    %cst = arith.constant dense<0.000000e+00> : vector<128xf32>
    %8 = vector.multi_reduction <add>, %6, %cst [0] : vector<4x128xf32> to vector<128xf32>
    %9 = vector.shape_cast %8 : vector<128xf32> to vector<1x128xf32>
    %10 = arith.addf %7, %9 : vector<1x128xf32>
    %c0_6 = arith.constant 0 : index
    %c0_7 = arith.constant 0 : index
    %11 = vector.load %arg10[%c0_6, %c0_7] : memref<1x128xf32, #tpu.memory_space<vmem>>, vector<1x128xf32>
    tpu.vector_store %arg10[%c0_6, %c0_7], %10 {strides = array<i32>} : memref<1x128xf32, #tpu.memory_space<vmem>>, vector<1x128xf32>,
    %c0_i32_8 = arith.constant 0 : i32
    %12 = arith.cmpi eq, %arg0, %c0_i32_8 : i32
    %13 = arith.extui %12 : i1 to i32
    %c0_i32_9 = arith.constant 0 : i32
    %14 = arith.cmpi ne, %13, %c0_i32_9 : i32
    scf.if %14 {
      %c0_10 = arith.constant 0 : index
      %c0_11 = arith.constant 0 : index
      %15 = vector.load %arg10[%c0_10, %c0_11] : memref<1x128xf32, #tpu.memory_space<vmem>>, vector<1x128xf32>
      %16 = vector.shape_cast %15 : vector<1x128xf32> to vector<1x1x128xf32>
      %cst_12 = arith.constant dense<0.000000e+00> : vector<1xf32>
      %17 = vector.multi_reduction <add>, %16, %cst_12 [1, 2] : vector<1x1x128xf32> to vector<1xf32>
      %18 = vector.shape_cast %17 : vector<1xf32> to vector<1x1x1xf32>
      %19 = vector.extract %18[0, 0, 0] : f32 from vector<1x1x1xf32>
      %cst_13 = arith.constant 0.001953125 : f32
      %20 = arith.mulf %19, %cst_13 : f32
      %c0_14 = arith.constant 0 : index
      %21 = memref.load %arg11[%c0_14] : memref<3xf32, #tpu.memory_space<smem>>
      %cst_15 = arith.constant 6.250000e-02 : f32
      %22 = arith.mulf %21, %cst_15 : f32
      %c1 = arith.constant 1 : index
      %23 = memref.load %arg11[%c1] : memref<3xf32, #tpu.memory_space<smem>>
      %cst_16 = arith.constant 6.250000e-02 : f32
      %24 = arith.mulf %23, %cst_16 : f32
      %c2 = arith.constant 2 : index
      %25 = memref.load %arg11[%c2] : memref<3xf32, #tpu.memory_space<smem>>
      %cst_17 = arith.constant 6.250000e-02 : f32
      %26 = arith.mulf %25, %cst_17 : f32
      %27 = arith.addf %20, %22 : f32
      %28 = arith.addf %27, %24 : f32
      %29 = arith.addf %28, %26 : f32
      %c0_18 = arith.constant 0 : index
      %30 = memref.load %arg9[%c0_18] : memref<5xf32, #tpu.memory_space<smem>>
      memref.store %29, %arg9[%c0_18] : memref<5xf32, #tpu.memory_space<smem>>
      %c1_19 = arith.constant 1 : index
      %31 = memref.load %arg9[%c1_19] : memref<5xf32, #tpu.memory_space<smem>>
      memref.store %20, %arg9[%c1_19] : memref<5xf32, #tpu.memory_space<smem>>
      %c2_20 = arith.constant 2 : index
      %32 = memref.load %arg9[%c2_20] : memref<5xf32, #tpu.memory_space<smem>>
      memref.store %22, %arg9[%c2_20] : memref<5xf32, #tpu.memory_space<smem>>
      %c3 = arith.constant 3 : index
      %33 = memref.load %arg9[%c3] : memref<5xf32, #tpu.memory_space<smem>>
      memref.store %24, %arg9[%c3] : memref<5xf32, #tpu.memory_space<smem>>
      %c4 = arith.constant 4 : index
      %34 = memref.load %arg9[%c4] : memref<5xf32, #tpu.memory_space<smem>>
      memref.store %26, %arg9[%c4] : memref<5xf32, #tpu.memory_space<smem>>
    } else {
    }
    return
  }
  func.func @transform_0(%arg0: i32) -> (i32, i32) {
    %c0_i32 = arith.constant 0 : i32
    %c0_i32_0 = arith.constant 0 : i32
    return %arg0, %c0_i32 : i32, i32
  }
  func.func @transform_1(%arg0: i32) -> (i32, i32) {
    %c0_i32 = arith.constant 0 : i32
    %c0_i32_0 = arith.constant 0 : i32
    return %arg0, %c0_i32 : i32, i32
  }
  func.func @transform_2(%arg0: i32) -> (i32, i32) {
    %c0_i32 = arith.constant 0 : i32
    %c0_i32_0 = arith.constant 0 : i32
    %c0_i32_1 = arith.constant 0 : i32
    return %c0_i32, %c0_i32_0 : i32, i32
  }
  func.func @transform_3(%arg0: i32) -> (i32, i32) {
    %c0_i32 = arith.constant 0 : i32
    %c0_i32_0 = arith.constant 0 : i32
    %c0_i32_1 = arith.constant 0 : i32
    return %c0_i32, %c0_i32_0 : i32, i32
  }
  func.func @transform_4(%arg0: i32) -> (i32, i32) {
    %c0_i32 = arith.constant 0 : i32
    %c0_i32_0 = arith.constant 0 : i32
    %c0_i32_1 = arith.constant 0 : i32
    return %c0_i32, %c0_i32_0 : i32, i32
  }
  func.func @transform_5(%arg0: i32) -> (i32, i32) {
    %c0_i32 = arith.constant 0 : i32
    %c0_i32_0 = arith.constant 0 : i32
    %c0_i32_1 = arith.constant 0 : i32
    return %c0_i32, %c0_i32_0 : i32, i32
  }
  func.func @transform_6(%arg0: i32) -> (i32, i32) {
    %c0_i32 = arith.constant 0 : i32
    %c0_i32_0 = arith.constant 0 : i32
    %c0_i32_1 = arith.constant 0 : i32
    return %c0_i32, %c0_i32_0 : i32, i32
  }
  func.func @transform_7(%arg0: i32) -> (i32, i32) {
    %c0_i32 = arith.constant 0 : i32
    %c0_i32_0 = arith.constant 0 : i32
    %c0_i32_1 = arith.constant 0 : i32
    return %c0_i32, %c0_i32_0 : i32, i32
  }
  func.func @transform_8(%arg0: i32) -> i32 {
    %c0_i32 = arith.constant 0 : i32
    %c0_i32_0 = arith.constant 0 : i32
    return %c0_i32 : i32
  }
}

</mosaic_0001>

<llo_original>
// kernel: tpu_custom_call.1
$region0: #{tpu_custom_call.1}
  #allocation0 [shape = 'u32[]', space=smem, size = 0x4, offset = 0x4, fixed_abs, tag = 'smem constant byte address 0x4 - core index']
  #allocation1 [shape = 'u32[144,128]{1,0:T(1,128)}', space=vmem, size = 0x12000, scoped, tag = 'internal scratch']
  #allocation2 [shape = 'f32[1,128]{1,0:T(1,128)}', space=vmem, size = 0x200, scoped, tag = 'scratch operand']
  #allocation3 [shape = 'f32[3]{0:T(128)}', space=smem, size = 0x200, scoped, tag = 'scratch operand']
  %s0 = inlined_call_operand.hbm [shape: f32[4,128], index: 0, kind: input, shape index: {}]
  %s1 = inlined_call_operand.hbm [shape: f32[4,128], index: 1, kind: input, shape index: {}]
  %s2 = inlined_call_operand.vmem [shape: f32[2,8], index: 2, kind: input, shape index: {}]
  %s3 = inlined_call_operand.vmem [shape: f32[2,8], index: 3, kind: input, shape index: {}]
  %s4 = inlined_call_operand.vmem [shape: f32[2,8], index: 4, kind: input, shape index: {}]
  %s5 = inlined_call_operand.vmem [shape: f32[2,8], index: 5, kind: input, shape index: {}]
  %s6 = inlined_call_operand.vmem [shape: f32[2,8], index: 6, kind: input, shape index: {}]
  %s7 = inlined_call_operand.vmem [shape: s32[2,8], index: 7, kind: input, shape index: {}]
  %s8 = inlined_call_operand.hbm [shape: f32[5], index: 8, kind: output, shape index: {}]
  %s9 = sld [smem:[#allocation0]]
  $region58: #{tpu_custom_call.1} parent=0
    _
  %s11 = ssub.s32 1, %s9
  %s12 = scalar_select 0, %s11, %s9
  $region1: #{tpu_custom_call.1} parent=0
    #allocation4 [shape = 'u8[2048]{0}', space=vmem, size = 0x800, scoped, tag = 'input window, operand 0, single buffered']
    #allocation5 [shape = 's32[1]{0}', space=sflag, size = 0x4, scoped, tag = 'scoped memory for tpu_custom_call.1']
    #allocation6 [shape = 's32[1]{0}', space=sflag, size = 0x4, scoped, tag = 'scoped memory for tpu_custom_call.1']
    #allocation7 [shape = 'u8[2048]{0}', space=vmem, size = 0x800, scoped, tag = 'input window, operand 1, single buffered']
    #allocation8 [shape = 's32[1]{0}', space=sflag, size = 0x4, scoped, tag = 'scoped memory for tpu_custom_call.1']
    #allocation9 [shape = 'u8[512]{0}', space=smem, size = 0x200, scoped, tag = 'output window, operand 0, single buffered']
    %13 = vsyncpa [#allocation5], 0
    %14 = vsyncpa [#allocation8], 0
    %15 = vsyncpa [#allocation6], 0
    // Predicated region
    $region2: #{tpu_custom_call.1} parent=1 // pred_check
      _
    $region3: #{tpu_custom_call.1} parent=1 // pred_check_branch
      %17 = sbr.rel (0) target = $region5
    $region4: #{tpu_custom_call.1} parent=1 // pred_region
      %s19 = ssub.s32 64, 64
      %20 = vsyncadd [#allocation5], %s19
      %s22 = sshll.u32 [#allocation4], 4
      %s23 = int_to_ptr.vmem [resolvable:$true] %s22
      %25 = dma.hbm_to_vmem [thread:$0]  %s0, 64, %s23, [#allocation5]
    $region5: #{tpu_custom_call.1} parent=1 // pred_fallthru
      _
    // Predicated region
    $region6: #{tpu_custom_call.1} parent=1 // pred_check
      _
    $region7: #{tpu_custom_call.1} parent=1 // pred_check_branch
      %27 = sbr.rel (0) target = $region9
    $region8: #{tpu_custom_call.1} parent=1 // pred_region
      %s29 = ssub.s32 64, 64
      %30 = vsyncadd [#allocation8], %s29
      %s32 = sshll.u32 [#allocation7], 4
      %s33 = int_to_ptr.vmem [resolvable:$true] %s32
      %35 = dma.hbm_to_vmem [thread:$0]  %s1, 64, %s33, [#allocation8]
    $region9: #{tpu_custom_call.1} parent=1 // pred_fallthru
      _
    // Predicated region
    $region10: #{tpu_custom_call.1} parent=1 // pred_check
      _
    $region11: #{tpu_custom_call.1} parent=1 // pred_check_branch
      %37 = sbr.rel (0) target = $region13
    $region12: #{tpu_custom_call.1} parent=1 // pred_region
      _
    $region13: #{tpu_custom_call.1} parent=1 // pred_fallthru
      _
    // Predicated region
    $region14: #{tpu_custom_call.1} parent=1 // pred_check
      _
    $region15: #{tpu_custom_call.1} parent=1 // pred_check_branch
      %39 = sbr.rel (0) target = $region17
    $region16: #{tpu_custom_call.1} parent=1 // pred_region
      _
    $region17: #{tpu_custom_call.1} parent=1 // pred_fallthru
      _
    // Predicated region
    $region18: #{tpu_custom_call.1} parent=1 // pred_check
      _
    $region19: #{tpu_custom_call.1} parent=1 // pred_check_branch
      %41 = sbr.rel (0) target = $region21
    $region20: #{tpu_custom_call.1} parent=1 // pred_region
      _
    $region21: #{tpu_custom_call.1} parent=1 // pred_fallthru
      _
    // Predicated region
    $region22: #{tpu_custom_call.1} parent=1 // pred_check
      _
    $region23: #{tpu_custom_call.1} parent=1 // pred_check_branch
      %43 = sbr.rel (0) target = $region25
    $region24: #{tpu_custom_call.1} parent=1 // pred_region
      _
    $region25: #{tpu_custom_call.1} parent=1 // pred_fallthru
      _
    // Predicated region
    $region26: #{tpu_custom_call.1} parent=1 // pred_check
      _
    $region27: #{tpu_custom_call.1} parent=1 // pred_check_branch
      %45 = sbr.rel (0) target = $region29
    $region28: #{tpu_custom_call.1} parent=1 // pred_region
      _
    $region29: #{tpu_custom_call.1} parent=1 // pred_fallthru
      _
    // Predicated region
    $region30: #{tpu_custom_call.1} parent=1 // pred_check
      _
    $region31: #{tpu_custom_call.1} parent=1 // pred_check_branch
      %47 = sbr.rel (0) target = $region33
    $region32: #{tpu_custom_call.1} parent=1 // pred_region
      _
    $region33: #{tpu_custom_call.1} parent=1 // pred_fallthru
      _
    // Predicated region
    $region34: #{tpu_custom_call.1} parent=1 // pred_check
      _
    $region35: #{tpu_custom_call.1} parent=1 // pred_check_branch
      %49 = sbr.rel (0) target = $region37
    $region36: #{tpu_custom_call.1} parent=1 // pred_region
      %50 = dma.done [#allocation5], 64
    $region37: #{tpu_custom_call.1} parent=1 // pred_fallthru
      _
    // Predicated region
    $region38: #{tpu_custom_call.1} parent=1 // pred_check
      _
    $region39: #{tpu_custom_call.1} parent=1 // pred_check_branch
      %52 = sbr.rel (0) target = $region41
    $region40: #{tpu_custom_call.1} parent=1 // pred_region
      %53 = dma.done [#allocation8], 64
    $region41: #{tpu_custom_call.1} parent=1 // pred_fallthru
      _
    %p54 = scmp.eq.s32.totalorder 0, 0
    // Predicated region
    $region42: #{tpu_custom_call.1} parent=1 // pred_check
      %p55 = pneg %p54
    $region43: #{tpu_custom_call.1} parent=1 // pred_check_branch
      %57 = sbr.rel (%p55) target = $region45
    $region44: #{tpu_custom_call.1} parent=1 // pred_region
      %58 = vst [vmem:[#allocation2] sm:$0x1] 0.0
      %v59 = vld [vmem:[%s2] sm:$0x3]
      %v60 = vld [vmem:[%s3] sm:$0x3]
      %v61 = vsub.f32 %v59, %v60
      %v62 = vld [vmem:[%s4] sm:$0x3]
      %v63 = vld [vmem:[%s5] sm:$0x3]
      %v64 = vsub.f32 %v62, %v63
      %v65 = vld [vmem:[%s7] sm:$0x3]
      %v66 = vcvt.s32.f32 %v65
      %v67 = vadd.f32 %v66, 1.0
      %v68 = vlog2.pop %v67
      %v69 = vmul.f32 %v68, 0.6931472
      %v70 = vld [vmem:[%s6] sm:$0x3]
      %v71 = vsub.f32 %v70, %v69
      %v72 = vmul.f32 %v61, %v61
      %vm73 = vcmask 58368
      %v74 = vsel %vm73, %v72, 0.0
      %75 = vadd.xlane.f32.xlu0 %v74
      %v76 = vpop.xlane.xlu0 %75
      %v77 = vrot.slane %v76, 4
      %v78 = vadd.f32 %v76, %v77
      %v79 = vrot.slane %v78, 2
      %v80 = vadd.f32 %v78, %v79
      %v81 = vrot.slane %v80, 1
      %v82 = vadd.f32 %v80, %v81
      %s83 = vtos %v82
      %s84 = scalar_lea.smem [#allocation3], 0
      %85 = sst [smem:[%s84]] %s83
      %v86 = vmul.f32 %v64, %v64
      %v87 = vsel %vm73, %v86, 0.0
      %88 = vadd.xlane.f32.xlu0 %v87
      %v89 = vpop.xlane.xlu0 %88
      %v90 = vrot.slane %v89, 4
      %v91 = vadd.f32 %v89, %v90
      %v92 = vrot.slane %v91, 2
      %v93 = vadd.f32 %v91, %v92
      %v94 = vrot.slane %v93, 1
      %v95 = vadd.f32 %v93, %v94
      %s96 = vtos %v95
      %s97 = scalar_lea.smem [#allocation3], 1
      %98 = sst [smem:[%s97]] %s96
      %v99 = vmul.f32 %v71, %v71
      %v100 = vsel %vm73, %v99, 0.0
      %101 = vadd.xlane.f32.xlu0 %v100
      %v102 = vpop.xlane.xlu0 %101
      %v103 = vrot.slane %v102, 4
      %v104 = vadd.f32 %v102, %v103
      %v105 = vrot.slane %v104, 2
      %v106 = vadd.f32 %v104, %v105
      %v107 = vrot.slane %v106, 1
      %v108 = vadd.f32 %v106, %v107
      %s109 = vtos %v108
      %s110 = scalar_lea.smem [#allocation3], 2
      %111 = sst [smem:[%s110]] %s109
    $region45: #{tpu_custom_call.1} parent=1 // pred_fallthru
      _
    %v112 = vld [vmem:[#allocation4] sm:$0xf]
    %v113 = vld [vmem:[#allocation7] sm:$0xf]
    %v114 = vsub.f32 %v112, %v113
    %v115 = vand.u32 2147483647, %v114
    %v116 = vld [vmem:[#allocation2] sm:$0x1]
    %vm117 = vcmask 1043456
    %v118 = vsel %vm117, %v115, 0.0
    %v119 = vrot.slane %v118, 4
    %v120 = vadd.f32 %v118, %v119
    %v121 = vrot.slane %v120, 2
    %v122 = vadd.f32 %v120, %v121
    %v123 = vrot.slane %v122, 1
    %v124 = vadd.f32 %v122, %v123
    %v125 = vadd.f32 %v116, %v124
    %126 = vst [vmem:[#allocation2] sm:$0x1] %v125
    // Predicated region
    $region46: #{tpu_custom_call.1} parent=1 // pred_check
      %p127 = pneg %p54
    $region47: #{tpu_custom_call.1} parent=1 // pred_check_branch
      %129 = sbr.rel (%p127) target = $region49
    $region48: #{tpu_custom_call.1} parent=1 // pred_region
      %v130 = vld [vmem:[#allocation2] sm:$0x1]
      %vm131 = vcmask 1040384
      %v132 = vsel %vm131, %v130, 0.0
      %133 = vadd.xlane.f32.xlu0 %v132
      %v134 = vpop.xlane.xlu0 %133
      %v135 = vrot.slane %v134, 4
      %v136 = vadd.f32 %v134, %v135
      %v137 = vrot.slane %v136, 2
      %v138 = vadd.f32 %v136, %v137
      %v139 = vrot.slane %v138, 1
      %v140 = vadd.f32 %v138, %v139
      %s141 = vtos %v140
      %s142 = smul.f32 %s141, 0.001953125
      %s143 = sld [smem:[#allocation3]]
      %s144 = smul.f32 %s143, 0.0625
      %s145 = sld [smem:[#allocation3 + $0x1]]
      %s146 = smul.f32 %s145, 0.0625
      %s147 = sld [smem:[#allocation3 + $0x2]]
      %s148 = smul.f32 %s147, 0.0625
      %s149 = sadd.f32 %s142, %s144
      %s150 = sadd.f32 %s149, %s146
      %s151 = sadd.f32 %s150, %s148
      %s152 = scalar_lea.smem [#allocation9], 0
      %153 = sst [smem:[%s152]] %s151
      %s154 = scalar_lea.smem [#allocation9], 1
      %155 = sst [smem:[%s154]] %s142
      %s156 = scalar_lea.smem [#allocation9], 2
      %157 = sst [smem:[%s156]] %s144
      %s158 = scalar_lea.smem [#allocation9], 3
      %159 = sst [smem:[%s158]] %s146
      %s160 = scalar_lea.smem [#allocation9], 4
      %161 = sst [smem:[%s160]] %s148
    $region49: #{tpu_custom_call.1} parent=1 // pred_fallthru
      _
    // Predicated region
    $region50: #{tpu_custom_call.1} parent=1 // pred_check
      _
    $region51: #{tpu_custom_call.1} parent=1 // pred_check_branch
      %163 = sbr.rel (0) target = $region53
    $region52: #{tpu_custom_call.1} parent=1 // pred_region
      %s165 = ssub.s32 16, 16
      %166 = vsyncadd [#allocation6], %s165
      %169 = dma.smem_to_hbm [#allocation9], 16, %s8, [#allocation6]
    $region53: #{tpu_custom_call.1} parent=1 // pred_fallthru
      _
    // Predicated region
    $region54: #{tpu_custom_call.1} parent=1 // pred_check
      _
    $region55: #{tpu_custom_call.1} parent=1 // pred_check_branch
      %171 = sbr.rel (0) target = $region57
    $region56: #{tpu_custom_call.1} parent=1 // pred_region
      %172 = dma.done [#allocation6], 16
    $region57: #{tpu_custom_call.1} parent=1 // pred_fallthru
      _
    %173 = sfence
    %174 = vsyncpa [#allocation5], 1
    %175 = vsyncpa [#allocation8], 1
    %176 = vsyncpa [#allocation6], 1

</llo_original>
